<compile_context>
chip_gen: v5e
topology: v5e:2x2
jax: 0.10.0
libtpu: 0.0.40
codegen_flags: <defaults>
</compile_context>

<pallas_src>
import jax
import jax.numpy as jnp
from jax.experimental import pallas as pl
from jax.experimental.pallas import tpu as pltpu


def fma_kernel(w_ref, b_ref, x_ref, o_ref):
    # w_ref, b_ref: (1,) scalars in SMEM; x_ref, o_ref: lane-dense VMEM tiles.
    w = w_ref[0]
    b = b_ref[0]
    o_ref[...] = x_ref[...] * w + b   # VPU vmul + vadd, no MXU involvement


LANES = 1024           # lane-dense width (multiple of 128 -> unmasked vst)
SUBLANES = 8
MAX_BLOCK_ROWS = 512   # (512, 1024) f32 block = 2 MiB; safe on v5e/v6e/v7x VMEM


@jax.jit
def net_forward(x, weight, bias):
    """Equivalent of Net.forward: y = x @ weight.T + bias, for nn.Linear(1, 1)."""
    B, Fin = x.shape
    Fout, Fin_w = weight.shape
    assert Fin == 1 and Fout == 1 and Fin_w == 1, "kernel specialized to Linear(1, 1)"

    dtype = x.dtype

    # --- Layout plumbing (static shape math, runs at trace time) -------------
    n = B
    rows = pl.cdiv(n, LANES)
    rows = ((rows + SUBLANES - 1) // SUBLANES) * SUBLANES   # sublane multiple
    tb = min(MAX_BLOCK_ROWS, rows)                          # block rows
    rows = ((rows + tb - 1) // tb) * tb                     # whole number of blocks
    n_padded = rows * LANES

    x_flat = x.reshape(-1)
    x_slab = jnp.pad(x_flat, (0, n_padded - n)).reshape(rows, LANES)

    w_scalar = weight.reshape(1).astype(dtype)
    b_scalar = bias.reshape(1).astype(dtype)

    # --- Tiled, pipelined elementwise FMA ------------------------------------
    y_slab = pl.pallas_call(
        fma_kernel,
        out_shape=jax.ShapeDtypeStruct((rows, LANES), dtype),
        grid=(rows // tb,),
        in_specs=[
            pl.BlockSpec(memory_space=pltpu.MemorySpace.SMEM),   # weight scalar
            pl.BlockSpec(memory_space=pltpu.MemorySpace.SMEM),   # bias scalar
            pl.BlockSpec((tb, LANES), lambda i: (i, 0)),         # x tile
        ],
        out_specs=pl.BlockSpec((tb, LANES), lambda i: (i, 0)),
        compiler_params=pltpu.CompilerParams(
            dimension_semantics=("parallel",)),  # megacore split on v7x; no-op elsewhere
    )(w_scalar, b_scalar, x_slab)

    # Drop padding, restore (B, Fout) layout.
    return y_slab.reshape(-1)[:n].reshape(B, Fout)


if __name__ == "__main__":
    key = jax.random.PRNGKey(0)

    # Deterministic parameters matching Net.__init__:
    #   fc1.weight = full((1, 1), 0.5), fc1.bias = full((1,), 1.0)
    weight = jnp.full((1, 1), 0.5, dtype=jnp.float32)
    bias = jnp.full((1,), 1.0, dtype=jnp.float32)

    # Small example input: batch=8, in_features=1 (Linear(1, 1) input).
    x_small = jax.random.normal(key, (8, 1), dtype=jnp.float32)
    y_small = jax.block_until_ready(net_forward(x_small, weight, bias))
    y_small_ref = x_small @ weight.T + bias
    assert y_small.shape == (8, 1)
    assert jnp.allclose(y_small, y_small_ref, atol=1e-6), "mismatch vs reference (small)"

    # Non-multiple batch to exercise the padding / lane-dense repack path.
    x_odd = jax.random.normal(jax.random.PRNGKey(1), (3000, 1), dtype=jnp.float32)
    y_odd = jax.block_until_ready(net_forward(x_odd, weight, bias))
    y_odd_ref = x_odd @ weight.T + bias
    assert y_odd.shape == (3000, 1)
    assert jnp.allclose(y_odd, y_odd_ref, atol=1e-6), "mismatch vs reference (padded)"

    print("KERNEL_OK")
</pallas_src>

<mosaic_0001>
module attributes {stable_mosaic.version = 11 : i64} {
  func.func @fma_kernel(%arg0: i32, %arg1: memref<1xf32, #tpu.memory_space<smem>>, %arg2: memref<1xf32, #tpu.memory_space<smem>>, %arg3: memref<8x1024xf32, #tpu.memory_space<vmem>>, %arg4: memref<8x1024xf32, #tpu.memory_space<vmem>>) attributes {dimension_semantics = [#tpu.dimension_semantics<parallel>], iteration_bounds = array<i64: 1>, scalar_prefetch = 0 : i64, scratch_operands = 0 : i64, tpu.core_type = #tpu.core_type<tc>, window_params = [{transform_indices = @transform_0, window_bounds = array<i64: 1>}, {transform_indices = @transform_1, window_bounds = array<i64: 1>}, {transform_indices = @transform_2, window_bounds = array<i64: 8, 1024>}, {transform_indices = @transform_3, window_bounds = array<i64: 8, 1024>}]} {
    %c0 = arith.constant 0 : index
    %0 = memref.load %arg1[%c0] : memref<1xf32, #tpu.memory_space<smem>>
    %c0_0 = arith.constant 0 : index
    %1 = memref.load %arg2[%c0_0] : memref<1xf32, #tpu.memory_space<smem>>
    %c0_1 = arith.constant 0 : index
    %c0_2 = arith.constant 0 : index
    %2 = vector.load %arg3[%c0_1, %c0_2] : memref<8x1024xf32, #tpu.memory_space<vmem>>, vector<8x1024xf32>
    %3 = vector.broadcast %0 : f32 to vector<8x1024xf32>
    %4 = arith.mulf %2, %3 : vector<8x1024xf32>
    %5 = vector.broadcast %1 : f32 to vector<8x1024xf32>
    %6 = arith.addf %4, %5 : vector<8x1024xf32>
    %c0_3 = arith.constant 0 : index
    %c0_4 = arith.constant 0 : index
    %7 = vector.load %arg4[%c0_3, %c0_4] : memref<8x1024xf32, #tpu.memory_space<vmem>>, vector<8x1024xf32>
    tpu.vector_store %arg4[%c0_3, %c0_4], %6 {strides = array<i32>} : memref<8x1024xf32, #tpu.memory_space<vmem>>, vector<8x1024xf32>,
    return
  }
  func.func @transform_0(%arg0: i32) -> i32 {
    %c0_i32 = arith.constant 0 : i32
    %c0_i32_0 = arith.constant 0 : i32
    return %c0_i32 : i32
  }
  func.func @transform_1(%arg0: i32) -> i32 {
    %c0_i32 = arith.constant 0 : i32
    %c0_i32_0 = arith.constant 0 : i32
    return %c0_i32 : i32
  }
  func.func @transform_2(%arg0: i32) -> (i32, i32) {
    %c0_i32 = arith.constant 0 : i32
    %c0_i32_0 = arith.constant 0 : i32
    return %arg0, %c0_i32 : i32, i32
  }
  func.func @transform_3(%arg0: i32) -> (i32, i32) {
    %c0_i32 = arith.constant 0 : i32
    %c0_i32_0 = arith.constant 0 : i32
    return %arg0, %c0_i32 : i32, i32
  }
}

</mosaic_0001>

<llo_original>
// kernel: net_forward.1
$region0: #{net_forward.1}
  #allocation0 [shape = 'u32[]', space=smem, size = 0x4, offset = 0x4, fixed_abs, tag = 'smem constant byte address 0x4 - core index']
  #allocation1 [shape = 'u32[72,128]{1,0:T(1,128)}', space=vmem, size = 0x9000, scoped, tag = 'internal scratch']
  #allocation2 [shape = 'f32[1]{0:T(128)S(6)}', space=smem, size = 0x200, scoped, tag = 'scoped memory for net_forward.1']
  #allocation3 [shape = 'f32[1]{0:T(128)S(6)}', space=smem, size = 0x200, scoped, tag = 'scoped memory for net_forward.1']
  %s0 = inlined_call_operand.<no memory space> [shape: f32[1], index: 0, kind: input, shape index: {}]
  %s1 = inlined_call_operand.<no memory space> [shape: f32[1], index: 1, kind: input, shape index: {}]
  %s2 = inlined_call_operand.vmem [shape: f32[8,1024], index: 2, kind: input, shape index: {}]
  %s3 = inlined_call_operand.vmem [shape: f32[8,1024], index: 3, kind: output, shape index: {}]
  %s4 = sld [smem:[#allocation0]]
  $region22: #{net_forward.1} parent=0
    _
  %s6 = ssub.s32 1, %s4
  %s7 = scalar_select 0, %s6, %s4
  %8 = sst [smem:[#allocation2]] %s0
  %9 = sst [smem:[#allocation3]] %s1
  // Predicated region
  $region2: #{net_forward.1} parent=0 // pred_check
    _
  $region3: #{net_forward.1} parent=0 // pred_check_branch
    %11 = sbr.rel (0) target = $region5
  $region4: #{net_forward.1} parent=0 // pred_region
    _
  $region5: #{net_forward.1} parent=0 // pred_fallthru
    _
  // Predicated region
  $region6: #{net_forward.1} parent=0 // pred_check
    _
  $region7: #{net_forward.1} parent=0 // pred_check_branch
    %13 = sbr.rel (0) target = $region9
  $region8: #{net_forward.1} parent=0 // pred_region
    _
  $region9: #{net_forward.1} parent=0 // pred_fallthru
    _
  // Predicated region
  $region10: #{net_forward.1} parent=0 // pred_check
    _
  $region11: #{net_forward.1} parent=0 // pred_check_branch
    %15 = sbr.rel (0) target = $region13
  $region12: #{net_forward.1} parent=0 // pred_region
    _
  $region13: #{net_forward.1} parent=0 // pred_fallthru
    _
  %s16 = sld [smem:[#allocation2]]
  %s17 = sld [smem:[#allocation3]]
  %v18 = vld [vmem:[%s2] sm:$0xff]
  %v19 = vld [vmem:[%s2 + $0x8] sm:$0xff]
  %v20 = vld [vmem:[%s2 + $0x10] sm:$0xff]
  %v21 = vld [vmem:[%s2 + $0x18] sm:$0xff]
  %v22 = vld [vmem:[%s2 + $0x20] sm:$0xff]
  %v23 = vld [vmem:[%s2 + $0x28] sm:$0xff]
  %v24 = vld [vmem:[%s2 + $0x30] sm:$0xff]
  %v25 = vld [vmem:[%s2 + $0x38] sm:$0xff]
  %v26 = vstv %s16
  %v27 = vmul.f32 %v18, %v26
  %v28 = vmul.f32 %v19, %v26
  %v29 = vmul.f32 %v20, %v26
  %v30 = vmul.f32 %v21, %v26
  %v31 = vmul.f32 %v22, %v26
  %v32 = vmul.f32 %v23, %v26
  %v33 = vmul.f32 %v24, %v26
  %v34 = vmul.f32 %v25, %v26
  %v35 = vstv %s17
  %v36 = vadd.f32 %v27, %v35
  %v37 = vadd.f32 %v28, %v35
  %v38 = vadd.f32 %v29, %v35
  %v39 = vadd.f32 %v30, %v35
  %v40 = vadd.f32 %v31, %v35
  %v41 = vadd.f32 %v32, %v35
  %v42 = vadd.f32 %v33, %v35
  %v43 = vadd.f32 %v34, %v35
  %44 = vst [vmem:[%s3] sm:$0xff] %v36
  %45 = vst [vmem:[%s3 + $0x8] sm:$0xff] %v37
  %46 = vst [vmem:[%s3 + $0x10] sm:$0xff] %v38
  %47 = vst [vmem:[%s3 + $0x18] sm:$0xff] %v39
  %48 = vst [vmem:[%s3 + $0x20] sm:$0xff] %v40
  %49 = vst [vmem:[%s3 + $0x28] sm:$0xff] %v41
  %50 = vst [vmem:[%s3 + $0x30] sm:$0xff] %v42
  %51 = vst [vmem:[%s3 + $0x38] sm:$0xff] %v43
  // Predicated region
  $region14: #{net_forward.1} parent=0 // pred_check
    _
  $region15: #{net_forward.1} parent=0 // pred_check_branch
    %53 = sbr.rel (0) target = $region17
  $region16: #{net_forward.1} parent=0 // pred_region
    _
  $region17: #{net_forward.1} parent=0 // pred_fallthru
    _
  // Predicated region
  $region18: #{net_forward.1} parent=0 // pred_check
    _
  $region19: #{net_forward.1} parent=0 // pred_check_branch
    %55 = sbr.rel (0) target = $region21
  $region20: #{net_forward.1} parent=0 // pred_region
    _
  $region21: #{net_forward.1} parent=0 // pred_fallthru
    _

</llo_original>
